<compile_context>
chip_gen: v7x
topology: tpu7x:2x2x1
jax: 0.10.0
libtpu: 0.0.40
codegen_flags: <defaults>
</compile_context>

<pallas_src>
import functools

import jax
import jax.numpy as jnp
from jax import lax
from jax.experimental import pallas as pl
from jax.experimental.pallas import tpu as pltpu

_CHUNK = 4096  # lanes per in-kernel strip (~0.4 MB per (17, chunk) f32 intermediate)


def ztomnet_kernel(x_ref, a1_ref, a2_ref, a3_ref, o_ref, xa_ref):
    """One batch tile. Batch on lanes, features on sublanes.

    x_ref : (1, TILE)   input scalars, one per lane
    a1_ref: (17, 8)     [fc1.w | fc1.b | 0..0] + ones-row generator
    a2_ref: (17, 17)    [fc2.w | fc2.b] + ones-row generator
    a3_ref: (1, 17)     [fc3.w | fc3.b]
    o_ref : (1, TILE)   output scalars
    xa_ref: (8, CHUNK)  scratch: homogeneous input [x; 1; 0; ...; 0]
    """
    chunk = xa_ref.shape[-1]
    n_chunks = x_ref.shape[-1] // chunk

    # Constant rows of the homogeneous input. Re-written every grid step (cheap)
    # rather than only at step 0, so it stays correct when the "parallel" grid
    # axis is partitioned across TensorCores (each core owns its own scratch).
    xa_ref[pl.ds(1, 1), :] = jnp.ones((1, chunk), jnp.float32)
    xa_ref[pl.ds(2, 6), :] = jnp.zeros((6, chunk), jnp.float32)

    # Tiny, VMEM-resident weights: hoist the reads out of the chunk loop.
    a1 = a1_ref[...]
    a2 = a2_ref[...]
    a3 = a3_ref[...]

    def body(c, carry):
        off = pl.multiple_of(c * chunk, chunk)
        # Homogeneous input: row 0 = x, row 1 = 1, rows 2..7 = 0.
        xa_ref[pl.ds(0, 1), :] = x_ref[:, pl.ds(off, chunk)]
        # fc1 (+bias) on the MXU; the augmented "1" row survives the ReLU.
        # TODO(synk): verify in the Mosaic dump that the small augmented weight
        # (not the wide activation) is the MXU-stationary operand; restructure
        # the dot if weight registers are reloaded per 128-lane group.
        h1 = jnp.maximum(
            jnp.dot(a1, xa_ref[...], preferred_element_type=jnp.float32), 0.0)  # (17, C)
        # fc2 (+bias) on the MXU.
        h2 = jnp.maximum(
            jnp.dot(a2, h1, preferred_element_type=jnp.float32), 0.0)           # (17, C)
        # fc3 (+bias) on the MXU; lane-dense store of the finished chunk.
        y = jnp.dot(a3, h2, preferred_element_type=jnp.float32)                 # (1, C)
        o_ref[:, pl.ds(off, chunk)] = y.astype(o_ref.dtype)
        return carry

    lax.fori_loop(0, n_chunks, body, 0, unroll=min(n_chunks, 8))


def _round_up(n, m):
    return ((n + m - 1) // m) * m


def _pack_augmented(params):
    """Pack torch-layout (W, b) params into homogeneous-coordinate matrices.

      a1 (17, 8) : col0 = fc1.weight[:,0], col1 = fc1.bias, cols 2..7 = 0,
                   row 16 = [0, 1, 0, ...]   (generates the "1" row of h1)
      a2 (17,17) : [:16,:16] = fc2.weight, [:16,16] = fc2.bias, [16,16] = 1
      a3 (1, 17) : [0,:16]  = fc3.weight,  [0,16]  = fc3.bias
    """
    W1, b1, W2, b2, W3, b3 = params
    a1 = jnp.zeros((17, 8), jnp.float32)
    a1 = a1.at[:16, 0].set(W1[:, 0]).at[:16, 1].set(b1).at[16, 1].set(1.0)
    a2 = jnp.zeros((17, 17), jnp.float32)
    a2 = a2.at[:16, :16].set(W2).at[:16, 16].set(b2).at[16, 16].set(1.0)
    a3 = jnp.zeros((1, 17), jnp.float32)
    a3 = a3.at[0, :16].set(W3[0]).at[0, 16].set(b3[0])
    return a1, a2, a3


@functools.partial(jax.jit, static_argnames=("tn",))
def ztomnet_forward(x, params, *, tn=32768):
    """x: (B, 1) float32 -> (B, 1) float32. Same math as torch ZTOMNet.forward."""
    B = x.shape[0]
    a1, a2, a3 = _pack_augmented(params)

    # Lane-dense tiling: chunk | tile | b_pad, all multiples of 128.
    chunk = min(_CHUNK, _round_up(max(B, 1), 128))
    want = _round_up(max(B, 1), chunk)                       # chunk-aligned padded batch
    tile = min(_round_up(max(tn, chunk), chunk), want)       # big tile amortizes step overhead
    if want // tile < 2 and want >= 2 * chunk:
        # Give the "parallel" batch grid exactly 2 steps so both v7x TCs get work.
        tile = _round_up(want // 2, chunk)
    b_pad = _round_up(want, tile)
    num_tiles = b_pad // tile

    x_lanes = jnp.pad(x.reshape(1, B), ((0, 0), (0, b_pad - B)))
    # TODO(synk): the pad above / slice below are extra HBM copies; fuse them into
    # producer/consumer (or mask the ragged tail in-kernel) if bandwidth-critical.

    # VMEM budget: double-buffered (1, tile) x/y blocks are padded to 8 sublanes
    # (~8x their data), plus the x_aug scratch and (unrolled) per-chunk intermediates.
    vmem_est = 4 * (2 * 2 * 8 * tile + 8 * chunk + 8 * 2 * 24 * chunk)
    vmem_limit = int(min(max(2 * vmem_est, 32 << 20), 64 << 20))

    pinned = lambda a: pl.BlockSpec(a.shape, lambda i: (0, 0))   # VMEM-resident weights

    out = pl.pallas_call(
        ztomnet_kernel,
        out_shape=jax.ShapeDtypeStruct((1, b_pad), jnp.float32),
        grid=(num_tiles,),
        in_specs=[
            pl.BlockSpec((1, tile), lambda i: (0, i)),           # x: pipelined batch tiles
            pinned(a1), pinned(a2), pinned(a3),
        ],
        out_specs=pl.BlockSpec((1, tile), lambda i: (0, i)),
        scratch_shapes=[pltpu.VMEM((8, chunk), jnp.float32)],    # homogeneous-input scratch
        compiler_params=pltpu.CompilerParams(
            dimension_semantics=("parallel",),                   # shard batch grid across TCs
            vmem_limit_bytes=vmem_limit,
        ),
    )(x_lanes, a1, a2, a3)

    return out[:, :B].reshape(B, 1)


def init_params(key):
    """Mirrors torch nn.Linear init (U(+/- 1/sqrt(fan_in))), torch (out, in) layout."""
    ks = jax.random.split(key, 6)

    def linear(kw, kb, fan_in, fan_out):
        bound = 1.0 / jnp.sqrt(jnp.float32(fan_in))
        w = jax.random.uniform(kw, (fan_out, fan_in), jnp.float32, -bound, bound)
        b = jax.random.uniform(kb, (fan_out,), jnp.float32, -bound, bound)
        return w, b

    W1, b1 = linear(ks[0], ks[1], 1, 16)
    W2, b2 = linear(ks[2], ks[3], 16, 16)
    W3, b3 = linear(ks[4], ks[5], 16, 1)
    return W1, b1, W2, b2, W3, b3


def reference_forward(x, params):
    """Plain-JAX reference, identical to the torch math."""
    W1, b1, W2, b2, W3, b3 = params
    h = jnp.maximum(x @ W1.T + b1, 0.0)     # (B, 16)
    h = jnp.maximum(h @ W2.T + b2, 0.0)     # (B, 16)
    return h @ W3.T + b3                    # (B, 1)


if __name__ == "__main__":
    key = jax.random.PRNGKey(0)
    kx, kx2, kp = jax.random.split(key, 3)
    params = init_params(kp)

    # Small case: single tile / single chunk, batch deliberately not a multiple of 128.
    B = 300
    x = jax.random.normal(kx, (B, 1), jnp.float32)
    out = ztomnet_forward(x, params)
    jax.block_until_ready(out)
    ref = reference_forward(x, params)
    assert out.shape == (B, 1)
    assert jnp.allclose(out, ref, atol=1e-3, rtol=1e-3), "mismatch vs. reference (B=300)"

    # Multi-tile / multi-chunk case: 2 'parallel' grid steps, 3 chunks per tile.
    B2 = 20000
    x2 = jax.random.normal(kx2, (B2, 1), jnp.float32)
    out2 = ztomnet_forward(x2, params, tn=16384)
    jax.block_until_ready(out2)
    ref2 = reference_forward(x2, params)
    assert out2.shape == (B2, 1)
    assert jnp.allclose(out2, ref2, atol=1e-3, rtol=1e-3), "mismatch vs. reference (B=20000)"

    print("KERNEL_OK")
</pallas_src>

<mosaic_0001>
module attributes {stable_mosaic.version = 11 : i64} {
  func.func @ztomnet_kernel(%arg0: i32, %arg1: memref<1x384xf32, #tpu.memory_space<vmem>>, %arg2: memref<17x8xf32, #tpu.memory_space<vmem>>, %arg3: memref<17x17xf32, #tpu.memory_space<vmem>>, %arg4: memref<1x17xf32, #tpu.memory_space<vmem>>, %arg5: memref<1x384xf32, #tpu.memory_space<vmem>>, %arg6: memref<8x384xf32, #tpu.memory_space<vmem>>) attributes {dimension_semantics = [#tpu.dimension_semantics<parallel>], iteration_bounds = array<i64: 1>, scalar_prefetch = 0 : i64, scratch_operands = 1 : i64, tpu.core_type = #tpu.core_type<tc>, window_params = [{transform_indices = @transform_0, window_bounds = array<i64: 1, 384>}, {pipeline_mode = #tpu.pipeline_mode<synchronous>, transform_indices = @transform_1, window_bounds = array<i64: 17, 8>}, {pipeline_mode = #tpu.pipeline_mode<synchronous>, transform_indices = @transform_2, window_bounds = array<i64: 17, 17>}, {pipeline_mode = #tpu.pipeline_mode<synchronous>, transform_indices = @transform_3, window_bounds = array<i64: 1, 17>}, {transform_indices = @transform_4, window_bounds = array<i64: 1, 384>}]} {
    %cst = arith.constant 1.000000e+00 : f32
    %0 = vector.broadcast %cst : f32 to vector<1x384xf32>
    %c1 = arith.constant 1 : index
    %c0 = arith.constant 0 : index
    %1 = vector.load %arg6[%c1, %c0] : memref<8x384xf32, #tpu.memory_space<vmem>>, vector<1x384xf32>
    tpu.vector_store %arg6[%c1, %c0], %0 {strides = array<i32>} : memref<8x384xf32, #tpu.memory_space<vmem>>, vector<1x384xf32>,
    %cst_0 = arith.constant 0.000000e+00 : f32
    %2 = vector.broadcast %cst_0 : f32 to vector<6x384xf32>
    %c2 = arith.constant 2 : index
    %c0_1 = arith.constant 0 : index
    %3 = vector.load %arg6[%c2, %c0_1] : memref<8x384xf32, #tpu.memory_space<vmem>>, vector<6x384xf32>
    tpu.vector_store %arg6[%c2, %c0_1], %2 {strides = array<i32>} : memref<8x384xf32, #tpu.memory_space<vmem>>, vector<6x384xf32>,
    %c0_2 = arith.constant 0 : index
    %c0_3 = arith.constant 0 : index
    %4 = vector.load %arg2[%c0_2, %c0_3] : memref<17x8xf32, #tpu.memory_space<vmem>>, vector<17x8xf32>
    %c0_4 = arith.constant 0 : index
    %c0_5 = arith.constant 0 : index
    %5 = vector.load %arg3[%c0_4, %c0_5] : memref<17x17xf32, #tpu.memory_space<vmem>>, vector<17x17xf32>
    %c0_6 = arith.constant 0 : index
    %c0_7 = arith.constant 0 : index
    %6 = vector.load %arg4[%c0_6, %c0_7] : memref<1x17xf32, #tpu.memory_space<vmem>>, vector<1x17xf32>
    %c0_i32 = arith.constant 0 : i32
    %c384_i32 = arith.constant 384 : i32
    %7 = arith.muli %c0_i32, %c384_i32 : i32
    %8 = tpu.assume_multiple %7, 384 : i32
    %c0_8 = arith.constant 0 : index
    %9 = arith.index_cast %8 : i32 to index
    %10 = vector.load %arg1[%c0_8, %9] : memref<1x384xf32, #tpu.memory_space<vmem>>, vector<1x384xf32>
    %c0_9 = arith.constant 0 : index
    %c0_10 = arith.constant 0 : index
    %11 = vector.load %arg6[%c0_9, %c0_10] : memref<8x384xf32, #tpu.memory_space<vmem>>, vector<1x384xf32>
    tpu.vector_store %arg6[%c0_9, %c0_10], %10 {strides = array<i32>} : memref<8x384xf32, #tpu.memory_space<vmem>>, vector<1x384xf32>,
    %c0_11 = arith.constant 0 : index
    %c0_12 = arith.constant 0 : index
    %12 = vector.load %arg6[%c0_11, %c0_12] : memref<8x384xf32, #tpu.memory_space<vmem>>, vector<8x384xf32>
    %cst_13 = arith.constant dense<0.000000e+00> : vector<17x384xf32>
    %13 = tpu.matmul %4, %12, %cst_13 {dimension_numbers = #tpu.dot_dimension_numbers<[1], [0], [0], [1], [0, 0, 1, 1], [], []>} : vector<17x8xf32>, vector<8x384xf32>, vector<17x384xf32> -> vector<17x384xf32>
    %cst_14 = arith.constant 0.000000e+00 : f32
    %14 = vector.broadcast %cst_14 : f32 to vector<17x384xf32>
    %15 = arith.maximumf %13, %14 : vector<17x384xf32>
    %cst_15 = arith.constant dense<0.000000e+00> : vector<17x384xf32>
    %16 = tpu.matmul %5, %15, %cst_15 {dimension_numbers = #tpu.dot_dimension_numbers<[1], [0], [0], [1], [0, 0, 1, 1], [], []>} : vector<17x17xf32>, vector<17x384xf32>, vector<17x384xf32> -> vector<17x384xf32>
    %cst_16 = arith.constant 0.000000e+00 : f32
    %17 = vector.broadcast %cst_16 : f32 to vector<17x384xf32>
    %18 = arith.maximumf %16, %17 : vector<17x384xf32>
    %cst_17 = arith.constant dense<0.000000e+00> : vector<1x384xf32>
    %19 = tpu.matmul %6, %18, %cst_17 {dimension_numbers = #tpu.dot_dimension_numbers<[1], [0], [0], [1], [0, 0, 1, 1], [], []>} : vector<1x17xf32>, vector<17x384xf32>, vector<1x384xf32> -> vector<1x384xf32>
    %c0_18 = arith.constant 0 : index
    %20 = arith.index_cast %8 : i32 to index
    %21 = vector.load %arg5[%c0_18, %20] : memref<1x384xf32, #tpu.memory_space<vmem>>, vector<1x384xf32>
    tpu.vector_store %arg5[%c0_18, %20], %19 {strides = array<i32>} : memref<1x384xf32, #tpu.memory_space<vmem>>, vector<1x384xf32>,
    %c1_i32 = arith.constant 1 : i32
    return
  }
  func.func @transform_0(%arg0: i32) -> (i32, i32) {
    %c0_i32 = arith.constant 0 : i32
    %c0_i32_0 = arith.constant 0 : i32
    return %c0_i32, %arg0 : i32, i32
  }
  func.func @transform_1(%arg0: i32) -> (i32, i32) {
    %c0_i32 = arith.constant 0 : i32
    %c0_i32_0 = arith.constant 0 : i32
    %c0_i32_1 = arith.constant 0 : i32
    return %c0_i32, %c0_i32_0 : i32, i32
  }
  func.func @transform_2(%arg0: i32) -> (i32, i32) {
    %c0_i32 = arith.constant 0 : i32
    %c0_i32_0 = arith.constant 0 : i32
    %c0_i32_1 = arith.constant 0 : i32
    return %c0_i32, %c0_i32_0 : i32, i32
  }
  func.func @transform_3(%arg0: i32) -> (i32, i32) {
    %c0_i32 = arith.constant 0 : i32
    %c0_i32_0 = arith.constant 0 : i32
    %c0_i32_1 = arith.constant 0 : i32
    return %c0_i32, %c0_i32_0 : i32, i32
  }
  func.func @transform_4(%arg0: i32) -> (i32, i32) {
    %c0_i32 = arith.constant 0 : i32
    %c0_i32_0 = arith.constant 0 : i32
    return %c0_i32, %arg0 : i32, i32
  }
}

</mosaic_0001>

<llo_original>
// kernel: ztomnet_forward.1
$region0: #{ztomnet_forward.1}
  #allocation0 [shape = 'u32[]', space=smem, size = 0x4, offset = 0x4, fixed_abs, tag = 'smem constant byte address 0x4 - core index']
  #allocation1 [shape = 'u32[144,128]{1,0:T(1,128)}', space=vmem, size = 0x12000, scoped, tag = 'internal scratch']
  #allocation2 [shape = 'f32[8,384]{1,0:T(8,128)}', space=vmem, size = 0x3000, scoped, tag = 'scratch operand']
  %s0 = inlined_call_operand.vmem [shape: f32[1,384], index: 0, kind: input, shape index: {}]
  %s1 = inlined_call_operand.vmem [shape: f32[17,8], index: 1, kind: input, shape index: {}]
  %s2 = inlined_call_operand.vmem [shape: f32[17,17], index: 2, kind: input, shape index: {}]
  %s3 = inlined_call_operand.vmem [shape: f32[1,17], index: 3, kind: input, shape index: {}]
  %s4 = inlined_call_operand.vmem [shape: f32[1,384], index: 4, kind: output, shape index: {}]
  %s5 = sld [smem:[#allocation0]]
  $region26: #{ztomnet_forward.1} parent=0
    _
  %s7 = ssub.s32 1, %s5
  %s8 = scalar_select 0, %s7, %s5
  // Predicated region
  $region2: #{ztomnet_forward.1} parent=0 // pred_check
    _
  $region3: #{ztomnet_forward.1} parent=0 // pred_check_branch
    %10 = sbr.rel (0) target = $region5
  $region4: #{ztomnet_forward.1} parent=0 // pred_region
    _
  $region5: #{ztomnet_forward.1} parent=0 // pred_fallthru
    _
  // Predicated region
  $region6: #{ztomnet_forward.1} parent=0 // pred_check
    _
  $region7: #{ztomnet_forward.1} parent=0 // pred_check_branch
    %12 = sbr.rel (0) target = $region9
  $region8: #{ztomnet_forward.1} parent=0 // pred_region
    _
  $region9: #{ztomnet_forward.1} parent=0 // pred_fallthru
    _
  // Predicated region
  $region10: #{ztomnet_forward.1} parent=0 // pred_check
    _
  $region11: #{ztomnet_forward.1} parent=0 // pred_check_branch
    %14 = sbr.rel (0) target = $region13
  $region12: #{ztomnet_forward.1} parent=0 // pred_region
    _
  $region13: #{ztomnet_forward.1} parent=0 // pred_fallthru
    _
  // Predicated region
  $region14: #{ztomnet_forward.1} parent=0 // pred_check
    _
  $region15: #{ztomnet_forward.1} parent=0 // pred_check_branch
    %16 = sbr.rel (0) target = $region17
  $region16: #{ztomnet_forward.1} parent=0 // pred_region
    _
  $region17: #{ztomnet_forward.1} parent=0 // pred_fallthru
    _
  %v17 = vlaneseq
  %vm18 = vcmp.ge.s32.totalorder %v17, 0
  %vm19 = vcmp.lt.s32.totalorder %v17, 384
  %vm20 = vmand %vm18, %vm19
  %s21 = scalar_lea.vmem [#allocation2], 1
  %22 = vst.msk [vmem:[%s21] ss:$8 sm:$0x7] %vm20, 1.0
  %23 = vst.msk [vmem:[%s21] ss:$8 sm:$0x0] %vm20, 1.0
  %24 = vst [vmem:[#allocation2] sm:$0xfc] 0.0
  %25 = vst [vmem:[#allocation2 + $0x8] sm:$0xfc] 0.0
  %26 = vst [vmem:[#allocation2 + $0x10] sm:$0xfc] 0.0
  %v27 = vld [vmem:[%s1] sm:$0xff]
  %v28 = vld [vmem:[%s1 + $0x8] sm:$0xff]
  %v29 = vld [vmem:[%s1 + $0x10] sm:$0x1]
  %v30 = vld [vmem:[%s2] sm:$0xff]
  %v31 = vld [vmem:[%s2 + $0x8] sm:$0xff]
  %v32 = vld [vmem:[%s2 + $0x10] sm:$0x1]
  %v33 = vld [vmem:[%s3] sm:$0x1]
  %v34 = vld [vmem:[%s0] sm:$0x7]
  %35 = vst.msk [vmem:[#allocation2] ss:$8 sm:$0x7] %vm20, %v34
  %36 = vst.msk [vmem:[#allocation2] ss:$8 sm:$0x0] %vm20, %v34
  %v37 = vld [vmem:[#allocation2] sm:$0xff]
  %v38 = vld [vmem:[#allocation2 + $0x8] sm:$0xff]
  %v39 = vld [vmem:[#allocation2 + $0x10] sm:$0xff]
  %vm40 = vcmask 64512
  %v42 = vsel %vm40, %v27, 0
  %v45 = vsel %vm40, %v28, 0
  %v48 = vsel %vm40, %v29, 0
  %50 = vmatprep.subr.mxu0 %v38
  %51 = vmatpush1.msra.mxu0 %v37
  %52 = vmatprep.subr.mxu0 0.0
  %53 = vmatpush1.msra.mxu0 0.0
  %54 = vmatprep.subr.mxu0 0.0
  %55 = vmatpush1.msra.mxu0 0.0
  %56 = vmatprep.subr.mxu0 0.0
  %57 = vmatpush1.msra.mxu0 0.0
  %58 = vmatprep.subr.mxu0 0.0
  %59 = vmatpush1.msra.mxu0 0.0
  %60 = vmatprep.subr.mxu0 0.0
  %61 = vmatpush1.msra.mxu0 0.0
  %62 = vmatprep.subr.mxu0 0.0
  %63 = vmatpush1.msra.mxu0 0.0
  %64 = vmatprep.subr.mxu0 0.0
  %65 = vmatpush1.msra.mxu0 0.0
  %66 = vmatprep.subr.mxu0 0.0
  %67 = vmatpush1.msra.mxu0 0.0
  %68 = vmatprep.subr.mxu0 0.0
  %69 = vmatpush1.msra.mxu0 0.0
  %70 = vmatprep.subr.mxu0 0.0
  %71 = vmatpush1.msra.mxu0 0.0
  %72 = vmatprep.subr.mxu0 0.0
  %73 = vmatpush1.msra.mxu0 0.0
  %74 = vmatprep.subr.mxu0 0.0
  %75 = vmatpush1.msra.mxu0 0.0
  %76 = vmatprep.subr.mxu0 0.0
  %77 = vmatpush1.msra.mxu0 0.0
  %78 = vmatprep.subr.mxu0 0.0
  %79 = vmatpush1.msra.mxu0 0.0
  %80 = vmatprep.subr.mxu0 0.0
  %81 = vmatpush1.msra.mxu0 0.0
  %82 = vmatprep.subr.mxu0 0.0
  %83 = vmatpush1.msra.mxu0 0.0
  %84 = vmatprep.subr.mxu0 0.0
  %85 = vmatpush1.msra.mxu0 0.0
  %86 = vmatprep.subr.mxu0 0.0
  %87 = vmatpush1.msra.mxu0 0.0
  %88 = vmatprep.subr.mxu0 0.0
  %89 = vmatpush1.msra.mxu0 0.0
  %90 = vmatprep.subr.mxu0 0.0
  %91 = vmatpush1.msra.mxu0 0.0
  %92 = vmatprep.subr.mxu0 0.0
  %93 = vmatpush1.msra.mxu0 0.0
  %94 = vmatprep.subr.mxu0 0.0
  %95 = vmatpush1.msra.mxu0 0.0
  %96 = vmatprep.subr.mxu0 0.0
  %97 = vmatpush1.msra.mxu0 0.0
  %98 = vmatprep.subr.mxu0 0.0
  %99 = vmatpush1.msra.mxu0 0.0
  %100 = vmatprep.subr.mxu0 0.0
  %101 = vmatpush1.msra.mxu0 0.0
  %102 = vmatprep.subr.mxu0 0.0
  %103 = vmatpush1.msra.mxu0 0.0
  %104 = vmatprep.subr.mxu0 0.0
  %105 = vmatpush1.msra.mxu0 0.0
  %106 = vmatprep.subr.mxu0 0.0
  %107 = vmatpush1.msra.mxu0 0.0
  %108 = vmatprep.subr.mxu0 0.0
  %109 = vmatpush1.msra.mxu0 0.0
  %110 = vmatprep.subr.mxu0 0.0
  %111 = vmatpush1.msra.mxu0 0.0
  %112 = vmatprep.subr.mxu0 0.0
  %113 = vmatpush1.msra.mxu0 0.0
  %114 = vmatprep.mubr.f32.mxu0 0.0
  %115 = vmatmul.mubr.f32.gmra.mrb[0].mxu0 %v42
  %v116 = vpop.f32.mrb[0].mxu0
  %v117 = vadd.f32 0.0, %v116
  %v118 = vpop.f32.mrb[0].mxu0
  %v119 = vadd.f32 0.0, %v118
  %120 = vmatprep.mubr.f32.mxu0 0.0
  %121 = vmatmul.mubr.f32.gmra.mrb[0].mxu0 %v45
  %v122 = vpop.f32.mrb[0].mxu0
  %v123 = vadd.f32 0.0, %v122
  %v124 = vpop.f32.mrb[0].mxu0
  %v125 = vadd.f32 0.0, %v124
  %126 = vmatprep.mubr.f32.mxu0 0.0
  %127 = vmatmul.mubr.f32.gmra.mrb[0].mxu0 %v48
  %v128 = vpop.f32.mrb[0].mxu0
  %v129 = vadd.f32 0.0, %v128
  %v130 = vpop.f32.mrb[0].mxu0
  %v131 = vadd.f32 0.0, %v130
  %132 = vdwg.mxu0
  %133 = vmatprep.subr.mxu0 0.0
  %134 = vmatpush1.msra.mxu0 %v39
  %135 = vmatprep.subr.mxu0 0.0
  %136 = vmatpush1.msra.mxu0 0.0
  %137 = vmatprep.subr.mxu0 0.0
  %138 = vmatpush1.msra.mxu0 0.0
  %139 = vmatprep.subr.mxu0 0.0
  %140 = vmatpush1.msra.mxu0 0.0
  %141 = vmatprep.subr.mxu0 0.0
  %142 = vmatpush1.msra.mxu0 0.0
  %143 = vmatprep.subr.mxu0 0.0
  %144 = vmatpush1.msra.mxu0 0.0
  %145 = vmatprep.subr.mxu0 0.0
  %146 = vmatpush1.msra.mxu0 0.0
  %147 = vmatprep.subr.mxu0 0.0
  %148 = vmatpush1.msra.mxu0 0.0
  %149 = vmatprep.subr.mxu0 0.0
  %150 = vmatpush1.msra.mxu0 0.0
  %151 = vmatprep.subr.mxu0 0.0
  %152 = vmatpush1.msra.mxu0 0.0
  %153 = vmatprep.subr.mxu0 0.0
  %154 = vmatpush1.msra.mxu0 0.0
  %155 = vmatprep.subr.mxu0 0.0
  %156 = vmatpush1.msra.mxu0 0.0
  %157 = vmatprep.subr.mxu0 0.0
  %158 = vmatpush1.msra.mxu0 0.0
  %159 = vmatprep.subr.mxu0 0.0
  %160 = vmatpush1.msra.mxu0 0.0
  %161 = vmatprep.subr.mxu0 0.0
  %162 = vmatpush1.msra.mxu0 0.0
  %163 = vmatprep.subr.mxu0 0.0
  %164 = vmatpush1.msra.mxu0 0.0
  %165 = vmatprep.subr.mxu0 0.0
  %166 = vmatpush1.msra.mxu0 0.0
  %167 = vmatprep.subr.mxu0 0.0
  %168 = vmatpush1.msra.mxu0 0.0
  %169 = vmatprep.subr.mxu0 0.0
  %170 = vmatpush1.msra.mxu0 0.0
  %171 = vmatprep.subr.mxu0 0.0
  %172 = vmatpush1.msra.mxu0 0.0
  %173 = vmatprep.subr.mxu0 0.0
  %174 = vmatpush1.msra.mxu0 0.0
  %175 = vmatprep.subr.mxu0 0.0
  %176 = vmatpush1.msra.mxu0 0.0
  %177 = vmatprep.subr.mxu0 0.0
  %178 = vmatpush1.msra.mxu0 0.0
  %179 = vmatprep.subr.mxu0 0.0
  %180 = vmatpush1.msra.mxu0 0.0
  %181 = vmatprep.subr.mxu0 0.0
  %182 = vmatpush1.msra.mxu0 0.0
  %183 = vmatprep.subr.mxu0 0.0
  %184 = vmatpush1.msra.mxu0 0.0
  %185 = vmatprep.subr.mxu0 0.0
  %186 = vmatpush1.msra.mxu0 0.0
  %187 = vmatprep.subr.mxu0 0.0
  %188 = vmatpush1.msra.mxu0 0.0
  %189 = vmatprep.subr.mxu0 0.0
  %190 = vmatpush1.msra.mxu0 0.0
  %191 = vmatprep.subr.mxu0 0.0
  %192 = vmatpush1.msra.mxu0 0.0
  %193 = vmatprep.subr.mxu0 0.0
  %194 = vmatpush1.msra.mxu0 0.0
  %195 = vmatprep.subr.mxu0 0.0
  %196 = vmatpush1.msra.mxu0 0.0
  %197 = vmatprep.mubr.f32.mxu0 0.0
  %198 = vmatmul.mubr.f32.gmra.mrb[0].mxu0 %v42
  %v199 = vpop.f32.mrb[0].mxu0
  %v200 = vadd.f32 0.0, %v199
  %v201 = vpop.f32.mrb[0].mxu0
  %202 = vmatprep.mubr.f32.mxu0 0.0
  %203 = vmatmul.mubr.f32.gmra.mrb[0].mxu0 %v45
  %v204 = vpop.f32.mrb[0].mxu0
  %v205 = vadd.f32 0.0, %v204
  %v206 = vpop.f32.mrb[0].mxu0
  %207 = vmatprep.mubr.f32.mxu0 0.0
  %208 = vmatmul.mubr.f32.gmra.mrb[0].mxu0 %v48
  %v209 = vpop.f32.mrb[0].mxu0
  %v210 = vadd.f32 0.0, %v209
  %v211 = vpop.f32.mrb[0].mxu0
  %212 = vdwg.mxu0
  %v213 = vmax.f32 %v117, 0.0
  %v214 = vmax.f32 %v119, 0.0
  %v215 = vmax.f32 %v200, 0.0
  %v216 = vmax.f32 %v123, 0.0
  %v217 = vmax.f32 %v125, 0.0
  %v218 = vmax.f32 %v205, 0.0
  %v219 = vmax.f32 %v129, 0.0
  %v220 = vmax.f32 %v131, 0.0
  %v221 = vmax.f32 %v210, 0.0
  %vm222 = vcmask 138240
  %v224 = vsel %vm222, %v30, 0
  %v227 = vsel %vm222, %v31, 0
  %v230 = vsel %vm222, %v32, 0
  %vm232 = vcmask 1040384
  %v234 = vsel %vm232, %v219, 0
  %v237 = vsel %vm232, %v220, 0
  %v240 = vsel %vm232, %v221, 0
  %242 = vmatprep.subr.mxu0 %v214
  %243 = vmatpush1.msra.mxu0 %v213
  %244 = vmatprep.subr.mxu0 %v217
  %245 = vmatpush1.msra.mxu0 %v216
  %246 = vmatprep.subr.mxu0 %v237
  %247 = vmatpush1.msra.mxu0 %v234
  %248 = vmatprep.subr.mxu0 0.0
  %249 = vmatpush1.msra.mxu0 0.0
  %250 = vmatprep.subr.mxu0 0.0
  %251 = vmatpush1.msra.mxu0 0.0
  %252 = vmatprep.subr.mxu0 0.0
  %253 = vmatpush1.msra.mxu0 0.0
  %254 = vmatprep.subr.mxu0 0.0
  %255 = vmatpush1.msra.mxu0 0.0
  %256 = vmatprep.subr.mxu0 0.0
  %257 = vmatpush1.msra.mxu0 0.0
  %258 = vmatprep.subr.mxu0 0.0
  %259 = vmatpush1.msra.mxu0 0.0
  %260 = vmatprep.subr.mxu0 0.0
  %261 = vmatpush1.msra.mxu0 0.0
  %262 = vmatprep.subr.mxu0 0.0
  %263 = vmatpush1.msra.mxu0 0.0
  %264 = vmatprep.subr.mxu0 0.0
  %265 = vmatpush1.msra.mxu0 0.0
  %266 = vmatprep.subr.mxu0 0.0
  %267 = vmatpush1.msra.mxu0 0.0
  %268 = vmatprep.subr.mxu0 0.0
  %269 = vmatpush1.msra.mxu0 0.0
  %270 = vmatprep.subr.mxu0 0.0
  %271 = vmatpush1.msra.mxu0 0.0
  %272 = vmatprep.subr.mxu0 0.0
  %273 = vmatpush1.msra.mxu0 0.0
  %274 = vmatprep.subr.mxu0 0.0
  %275 = vmatpush1.msra.mxu0 0.0
  %276 = vmatprep.subr.mxu0 0.0
  %277 = vmatpush1.msra.mxu0 0.0
  %278 = vmatprep.subr.mxu0 0.0
  %279 = vmatpush1.msra.mxu0 0.0
  %280 = vmatprep.subr.mxu0 0.0
  %281 = vmatpush1.msra.mxu0 0.0
  %282 = vmatprep.subr.mxu0 0.0
  %283 = vmatpush1.msra.mxu0 0.0
  %284 = vmatprep.subr.mxu0 0.0
  %285 = vmatpush1.msra.mxu0 0.0
  %286 = vmatprep.subr.mxu0 0.0
  %287 = vmatpush1.msra.mxu0 0.0
  %288 = vmatprep.subr.mxu0 0.0
  %289 = vmatpush1.msra.mxu0 0.0
  %290 = vmatprep.subr.mxu0 0.0
  %291 = vmatpush1.msra.mxu0 0.0
  %292 = vmatprep.subr.mxu0 0.0
  %293 = vmatpush1.msra.mxu0 0.0
  %294 = vmatprep.subr.mxu0 0.0
  %295 = vmatpush1.msra.mxu0 0.0
  %296 = vmatprep.subr.mxu0 0.0
  %297 = vmatpush1.msra.mxu0 0.0
  %298 = vmatprep.subr.mxu0 0.0
  %299 = vmatpush1.msra.mxu0 0.0
  %300 = vmatprep.subr.mxu0 0.0
  %301 = vmatpush1.msra.mxu0 0.0
  %302 = vmatprep.subr.mxu0 0.0
  %303 = vmatpush1.msra.mxu0 0.0
  %304 = vmatprep.subr.mxu0 0.0
  %305 = vmatpush1.msra.mxu0 0.0
  %306 = vmatprep.mubr.f32.mxu0 0.0
  %307 = vmatmul.mubr.f32.gmra.mrb[0].mxu0 %v224
  %v308 = vpop.f32.mrb[0].mxu0
  %v309 = vadd.f32 0.0, %v308
  %v310 = vpop.f32.mrb[0].mxu0
  %v311 = vadd.f32 0.0, %v310
  %312 = vmatprep.mubr.f32.mxu0 0.0
  %313 = vmatmul.mubr.f32.gmra.mrb[0].mxu0 %v227
  %v314 = vpop.f32.mrb[0].mxu0
  %v315 = vadd.f32 0.0, %v314
  %v316 = vpop.f32.mrb[0].mxu0
  %v317 = vadd.f32 0.0, %v316
  %318 = vmatprep.mubr.f32.mxu0 0.0
  %319 = vmatmul.mubr.f32.gmra.mrb[0].mxu0 %v230
  %v320 = vpop.f32.mrb[0].mxu0
  %v321 = vadd.f32 0.0, %v320
  %v322 = vpop.f32.mrb[0].mxu0
  %v323 = vadd.f32 0.0, %v322
  %324 = vdwg.mxu0
  %325 = vmatprep.subr.mxu0 0.0
  %326 = vmatpush1.msra.mxu0 %v215
  %327 = vmatprep.subr.mxu0 0.0
  %328 = vmatpush1.msra.mxu0 %v218
  %329 = vmatprep.subr.mxu0 0.0
  %330 = vmatpush1.msra.mxu0 %v240
  %331 = vmatprep.subr.mxu0 0.0
  %332 = vmatpush1.msra.mxu0 0.0
  %333 = vmatprep.subr.mxu0 0.0
  %334 = vmatpush1.msra.mxu0 0.0
  %335 = vmatprep.subr.mxu0 0.0
  %336 = vmatpush1.msra.mxu0 0.0
  %337 = vmatprep.subr.mxu0 0.0
  %338 = vmatpush1.msra.mxu0 0.0
  %339 = vmatprep.subr.mxu0 0.0
  %340 = vmatpush1.msra.mxu0 0.0
  %341 = vmatprep.subr.mxu0 0.0
  %342 = vmatpush1.msra.mxu0 0.0
  %343 = vmatprep.subr.mxu0 0.0
  %344 = vmatpush1.msra.mxu0 0.0
  %345 = vmatprep.subr.mxu0 0.0
  %346 = vmatpush1.msra.mxu0 0.0
  %347 = vmatprep.subr.mxu0 0.0
  %348 = vmatpush1.msra.mxu0 0.0
  %349 = vmatprep.subr.mxu0 0.0
  %350 = vmatpush1.msra.mxu0 0.0
  %351 = vmatprep.subr.mxu0 0.0
  %352 = vmatpush1.msra.mxu0 0.0
  %353 = vmatprep.subr.mxu0 0.0
  %354 = vmatpush1.msra.mxu0 0.0
  %355 = vmatprep.subr.mxu0 0.0
  %356 = vmatpush1.msra.mxu0 0.0
  %357 = vmatprep.subr.mxu0 0.0
  %358 = vmatpush1.msra.mxu0 0.0
  %359 = vmatprep.subr.mxu0 0.0
  %360 = vmatpush1.msra.mxu0 0.0
  %361 = vmatprep.subr.mxu0 0.0
  %362 = vmatpush1.msra.mxu0 0.0
  %363 = vmatprep.subr.mxu0 0.0
  %364 = vmatpush1.msra.mxu0 0.0
  %365 = vmatprep.subr.mxu0 0.0
  %366 = vmatpush1.msra.mxu0 0.0
  %367 = vmatprep.subr.mxu0 0.0
  %368 = vmatpush1.msra.mxu0 0.0
  %369 = vmatprep.subr.mxu0 0.0
  %370 = vmatpush1.msra.mxu0 0.0
  %371 = vmatprep.subr.mxu0 0.0
  %372 = vmatpush1.msra.mxu0 0.0
  %373 = vmatprep.subr.mxu0 0.0
  %374 = vmatpush1.msra.mxu0 0.0
  %375 = vmatprep.subr.mxu0 0.0
  %376 = vmatpush1.msra.mxu0 0.0
  %377 = vmatprep.subr.mxu0 0.0
  %378 = vmatpush1.msra.mxu0 0.0
  %379 = vmatprep.subr.mxu0 0.0
  %380 = vmatpush1.msra.mxu0 0.0
  %381 = vmatprep.subr.mxu0 0.0
  %382 = vmatpush1.msra.mxu0 0.0
  %383 = vmatprep.subr.mxu0 0.0
  %384 = vmatpush1.msra.mxu0 0.0
  %385 = vmatprep.subr.mxu0 0.0
  %386 = vmatpush1.msra.mxu0 0.0
  %387 = vmatprep.subr.mxu0 0.0
  %388 = vmatpush1.msra.mxu0 0.0
  %389 = vmatprep.mubr.f32.mxu0 0.0
  %390 = vmatmul.mubr.f32.gmra.mrb[0].mxu0 %v224
  %v391 = vpop.f32.mrb[0].mxu0
  %v392 = vadd.f32 0.0, %v391
  %v393 = vpop.f32.mrb[0].mxu0
  %394 = vmatprep.mubr.f32.mxu0 0.0
  %395 = vmatmul.mubr.f32.gmra.mrb[0].mxu0 %v227
  %v396 = vpop.f32.mrb[0].mxu0
  %v397 = vadd.f32 0.0, %v396
  %v398 = vpop.f32.mrb[0].mxu0
  %399 = vmatprep.mubr.f32.mxu0 0.0
  %400 = vmatmul.mubr.f32.gmra.mrb[0].mxu0 %v230
  %v401 = vpop.f32.mrb[0].mxu0
  %v402 = vadd.f32 0.0, %v401
  %v403 = vpop.f32.mrb[0].mxu0
  %404 = vdwg.mxu0
  %v405 = vmax.f32 %v309, 0.0
  %v406 = vmax.f32 %v311, 0.0
  %v407 = vmax.f32 %v392, 0.0
  %v408 = vmax.f32 %v315, 0.0
  %v409 = vmax.f32 %v317, 0.0
  %v410 = vmax.f32 %v397, 0.0
  %v411 = vmax.f32 %v321, 0.0
  %v412 = vmax.f32 %v323, 0.0
  %v413 = vmax.f32 %v402, 0.0
  %v415 = vsel %vm222, %v33, 0
  %v418 = vsel %vm232, %v411, 0
  %v421 = vsel %vm232, %v412, 0
  %v424 = vsel %vm232, %v413, 0
  %426 = vmatprep.subr.mxu0 %v406
  %427 = vmatpush1.msra.mxu0 %v405
  %428 = vmatprep.subr.mxu0 %v409
  %429 = vmatpush1.msra.mxu0 %v408
  %430 = vmatprep.subr.mxu0 %v421
  %431 = vmatpush1.msra.mxu0 %v418
  %432 = vmatprep.subr.mxu0 0.0
  %433 = vmatpush1.msra.mxu0 0.0
  %434 = vmatprep.subr.mxu0 0.0
  %435 = vmatpush1.msra.mxu0 0.0
  %436 = vmatprep.subr.mxu0 0.0
  %437 = vmatpush1.msra.mxu0 0.0
  %438 = vmatprep.subr.mxu0 0.0
  %439 = vmatpush1.msra.mxu0 0.0
  %440 = vmatprep.subr.mxu0 0.0
  %441 = vmatpush1.msra.mxu0 0.0
  %442 = vmatprep.subr.mxu0 0.0
  %443 = vmatpush1.msra.mxu0 0.0
  %444 = vmatprep.subr.mxu0 0.0
  %445 = vmatpush1.msra.mxu0 0.0
  %446 = vmatprep.subr.mxu0 0.0
  %447 = vmatpush1.msra.mxu0 0.0
  %448 = vmatprep.subr.mxu0 0.0
  %449 = vmatpush1.msra.mxu0 0.0
  %450 = vmatprep.subr.mxu0 0.0
  %451 = vmatpush1.msra.mxu0 0.0
  %452 = vmatprep.subr.mxu0 0.0
  %453 = vmatpush1.msra.mxu0 0.0
  %454 = vmatprep.subr.mxu0 0.0
  %455 = vmatpush1.msra.mxu0 0.0
  %456 = vmatprep.subr.mxu0 0.0
  %457 = vmatpush1.msra.mxu0 0.0
  %458 = vmatprep.subr.mxu0 0.0
  %459 = vmatpush1.msra.mxu0 0.0
  %460 = vmatprep.subr.mxu0 0.0
  %461 = vmatpush1.msra.mxu0 0.0
  %462 = vmatprep.subr.mxu0 0.0
  %463 = vmatpush1.msra.mxu0 0.0
  %464 = vmatprep.subr.mxu0 0.0
  %465 = vmatpush1.msra.mxu0 0.0
  %466 = vmatprep.subr.mxu0 0.0
  %467 = vmatpush1.msra.mxu0 0.0
  %468 = vmatprep.subr.mxu0 0.0
  %469 = vmatpush1.msra.mxu0 0.0
  %470 = vmatprep.subr.mxu0 0.0
  %471 = vmatpush1.msra.mxu0 0.0
  %472 = vmatprep.subr.mxu0 0.0
  %473 = vmatpush1.msra.mxu0 0.0
  %474 = vmatprep.subr.mxu0 0.0
  %475 = vmatpush1.msra.mxu0 0.0
  %476 = vmatprep.subr.mxu0 0.0
  %477 = vmatpush1.msra.mxu0 0.0
  %478 = vmatprep.subr.mxu0 0.0
  %479 = vmatpush1.msra.mxu0 0.0
  %480 = vmatprep.subr.mxu0 0.0
  %481 = vmatpush1.msra.mxu0 0.0
  %482 = vmatprep.subr.mxu0 0.0
  %483 = vmatpush1.msra.mxu0 0.0
  %484 = vmatprep.subr.mxu0 0.0
  %485 = vmatpush1.msra.mxu0 0.0
  %486 = vmatprep.subr.mxu0 0.0
  %487 = vmatpush1.msra.mxu0 0.0
  %488 = vmatprep.subr.mxu0 0.0
  %489 = vmatpush1.msra.mxu0 0.0
  %490 = vmatprep.mubr.f32.mxu0 0.0
  %491 = vmatmul.mubr.f32.gmra.mrb[0].mxu0 %v415
  %v492 = vpop.f32.mrb[0].mxu0
  %v493 = vadd.f32 0.0, %v492
  %v494 = vpop.f32.mrb[0].mxu0
  %v495 = vadd.f32 0.0, %v494
  %496 = vdwg.mxu0
  %497 = vmatprep.subr.mxu0 0.0
  %498 = vmatpush1.msra.mxu0 %v407
  %499 = vmatprep.subr.mxu0 0.0
  %500 = vmatpush1.msra.mxu0 %v410
  %501 = vmatprep.subr.mxu0 0.0
  %502 = vmatpush1.msra.mxu0 %v424
  %503 = vmatprep.subr.mxu0 0.0
  %504 = vmatpush1.msra.mxu0 0.0
  %505 = vmatprep.subr.mxu0 0.0
  %506 = vmatpush1.msra.mxu0 0.0
  %507 = vmatprep.subr.mxu0 0.0
  %508 = vmatpush1.msra.mxu0 0.0
  %509 = vmatprep.subr.mxu0 0.0
  %510 = vmatpush1.msra.mxu0 0.0
  %511 = vmatprep.subr.mxu0 0.0
  %512 = vmatpush1.msra.mxu0 0.0
  %513 = vmatprep.subr.mxu0 0.0
  %514 = vmatpush1.msra.mxu0 0.0
  %515 = vmatprep.subr.mxu0 0.0
  %516 = vmatpush1.msra.mxu0 0.0
  %517 = vmatprep.subr.mxu0 0.0
  %518 = vmatpush1.msra.mxu0 0.0
  %519 = vmatprep.subr.mxu0 0.0
  %520 = vmatpush1.msra.mxu0 0.0
  %521 = vmatprep.subr.mxu0 0.0
  %522 = vmatpush1.msra.mxu0 0.0
  %523 = vmatprep.subr.mxu0 0.0
  %524 = vmatpush1.msra.mxu0 0.0
  %525 = vmatprep.subr.mxu0 0.0
  %526 = vmatpush1.msra.mxu0 0.0
  %527 = vmatprep.subr.mxu0 0.0
  %528 = vmatpush1.msra.mxu0 0.0
  %529 = vmatprep.subr.mxu0 0.0
  %530 = vmatpush1.msra.mxu0 0.0
  %531 = vmatprep.subr.mxu0 0.0
  %532 = vmatpush1.msra.mxu0 0.0
  %533 = vmatprep.subr.mxu0 0.0
  %534 = vmatpush1.msra.mxu0 0.0
  %535 = vmatprep.subr.mxu0 0.0
  %536 = vmatpush1.msra.mxu0 0.0
  %537 = vmatprep.subr.mxu0 0.0
  %538 = vmatpush1.msra.mxu0 0.0
  %539 = vmatprep.subr.mxu0 0.0
  %540 = vmatpush1.msra.mxu0 0.0
  %541 = vmatprep.subr.mxu0 0.0
  %542 = vmatpush1.msra.mxu0 0.0
  %543 = vmatprep.subr.mxu0 0.0
  %544 = vmatpush1.msra.mxu0 0.0
  %545 = vmatprep.subr.mxu0 0.0
  %546 = vmatpush1.msra.mxu0 0.0
  %547 = vmatprep.subr.mxu0 0.0
  %548 = vmatpush1.msra.mxu0 0.0
  %549 = vmatprep.subr.mxu0 0.0
  %550 = vmatpush1.msra.mxu0 0.0
  %551 = vmatprep.subr.mxu0 0.0
  %552 = vmatpush1.msra.mxu0 0.0
  %553 = vmatprep.subr.mxu0 0.0
  %554 = vmatpush1.msra.mxu0 0.0
  %555 = vmatprep.subr.mxu0 0.0
  %556 = vmatpush1.msra.mxu0 0.0
  %557 = vmatprep.subr.mxu0 0.0
  %558 = vmatpush1.msra.mxu0 0.0
  %559 = vmatprep.subr.mxu0 0.0
  %560 = vmatpush1.msra.mxu0 0.0
  %561 = vmatprep.mubr.f32.mxu0 0.0
  %562 = vmatmul.mubr.f32.gmra.mrb[0].mxu0 %v415
  %v563 = vpop.f32.mrb[0].mxu0
  %v564 = vadd.f32 0.0, %v563
  %v565 = vpop.f32.mrb[0].mxu0
  %566 = vdwg.mxu0
  %v570 = vcombine.low %v493, %v495
  %v572 = vunpack.c.l.s4 1966171168
  %v573 = vunpack.c.0.s8 %v572
  %v574 = vlaneseq
  %v575 = vshrl.u32 %v574, 7
  %v576 = vsub.s32 %v573, %v575
  %v577 = vrot.slane %v570, %v576
  %v579 = vunpack.c.l.s4 1966171168
  %v580 = vunpack.c.0.s8 %v579
  %v581 = vlaneseq
  %v582 = vshrl.u32 %v581, 7
  %v583 = vsub.s32 %v580, %v582
  %v584 = vrot.slane %v564, %v583
  %v585 = vcombine.low %v577, %v584
  %v587 = vunpack.c.l.s4 1966171168
  %v588 = vunpack.c.0.s8 %v587
  %v589 = vlaneseq
  %v590 = vshrl.u32 %v589, 7
  %v591 = vsub.s32 %v588, %v590
  %v592 = vrot.slane %v585, %v591
  %594 = vst.msk [vmem:[%s4] sm:$0x7] %vm20, %v592
  // Predicated region
  $region18: #{ztomnet_forward.1} parent=0 // pred_check
    _
  $region19: #{ztomnet_forward.1} parent=0 // pred_check_branch
    %596 = sbr.rel (0) target = $region21
  $region20: #{ztomnet_forward.1} parent=0 // pred_region
    _
  $region21: #{ztomnet_forward.1} parent=0 // pred_fallthru
    _
  // Predicated region
  $region22: #{ztomnet_forward.1} parent=0 // pred_check
    _
  $region23: #{ztomnet_forward.1} parent=0 // pred_check_branch
    %598 = sbr.rel (0) target = $region25
  $region24: #{ztomnet_forward.1} parent=0 // pred_region
    _
  $region25: #{ztomnet_forward.1} parent=0 // pred_fallthru
    _

</llo_original>
